<compile_context>
chip_gen: v5e
topology: v5e:2x2
jax: 0.10.0
libtpu: 0.0.40
codegen_flags: <defaults>
</compile_context>

<pallas_src>
import jax
import jax.numpy as jnp
from jax.experimental import pallas as pl
from jax.experimental.pallas import tpu as pltpu

# ---- model hyper-parameters (consistent with the module defaults) ----
D_MODEL = 32
NHEAD = 4
MLP_RATIO = 4.0
HEADDIM = D_MODEL // NHEAD          # 8
HIDDEN = int(D_MODEL * MLP_RATIO)   # 128
SCALE = HEADDIM ** (-0.5)
LN_EPS = 1e-5

BATCH = 2
SEQ = 8
NTOK = BATCH * SEQ                  # 16
NEG_INF = -1e30

# ---- f32 parameter-slab row layout (lanes = 32) ----
_ROW_BQKV = 0                        # rows 0:96,  lanes 0:16  (pre-broadcast, q pre-scaled)
_ROW_MASK = 96                       # rows 96:112, lanes 0:16 (additive cross-batch mask)
_ROW_LN1G = 112
_ROW_LN1B = 113
_ROW_LN2G = 114
_ROW_LN2B = 115
_ROW_BPROJ = 116
_ROW_B2 = 117
_ROW_B1 = 118                        # rows 118:122 = b1 as 4 rows of 32
P32_ROWS = 128
_B1_ROWS = HIDDEN // D_MODEL         # 4

WSLAB_ROWS = 3 * D_MODEL + D_MODEL + HIDDEN   # 96 + 32 + 128 = 256


def _layernorm(x, gamma, beta):
    # x: (N, D); gamma/beta: (1, D)  -- f32 math
    mu = jnp.mean(x, axis=-1, keepdims=True)
    var = jnp.mean((x - mu) ** 2, axis=-1, keepdims=True)
    inv = jax.lax.rsqrt(var + LN_EPS)
    return (x - mu) * inv * gamma + beta


def _gelu_exact(x):
    # PyTorch F.gelu default is the exact (erf-based) GELU.
    return 0.5 * x * (1.0 + jax.lax.erf(x * 0.7071067811865476))


def transformer_block_kernel(x_ref, wslab_ref, w1_ref, p32_ref, out_ref):
    f32 = jnp.float32
    bf16 = jnp.bfloat16

    x = x_ref[...]                                   # (NTOK, D) f32
    p = p32_ref[...]                                 # (P32_ROWS, D) f32
    ws = wslab_ref[...]                              # (WSLAB_ROWS, D) bf16

    # ---- unpack f32 parameter slab (static value slices, no extra DMA) ----
    bqkvT = p[_ROW_BQKV:_ROW_BQKV + 3 * D_MODEL, 0:NTOK]     # (96, 16)
    mask = p[_ROW_MASK:_ROW_MASK + NTOK, 0:NTOK]             # (16, 16)
    ln1_g = p[_ROW_LN1G:_ROW_LN1G + 1]
    ln1_b = p[_ROW_LN1B:_ROW_LN1B + 1]
    ln2_g = p[_ROW_LN2G:_ROW_LN2G + 1]
    ln2_b = p[_ROW_LN2B:_ROW_LN2B + 1]
    bproj = p[_ROW_BPROJ:_ROW_BPROJ + 1]
    b2 = p[_ROW_B2:_ROW_B2 + 1]
    b1 = jnp.concatenate(
        [p[_ROW_B1 + i:_ROW_B1 + i + 1, :] for i in range(_B1_ROWS)],
        axis=-1)                                             # (1, HIDDEN) f32

    # ---- unpack bf16 weight slab ----
    wqkvT = ws[0:3 * D_MODEL]                                 # (96, 32)  q rows pre-scaled
    wprojH = ws[3 * D_MODEL:4 * D_MODEL].reshape(NHEAD, HEADDIM, D_MODEL)  # (4, 8, 32)
    w2 = ws[4 * D_MODEL:4 * D_MODEL + HIDDEN]                 # (128, 32)

    # ---------------- attention branch ----------------
    xn = _layernorm(x, ln1_g, ln1_b)                          # (NTOK, D) f32

    # QKV in transposed layout: rows = output features, cols = tokens, so
    # q/k/v and the per-head splits are free, tile-aligned sublane slices.
    qkvT = jnp.einsum('kd,nd->kn', wqkvT, xn.astype(bf16),
                      preferred_element_type=f32) + bqkvT     # (96, NTOK) f32

    q3 = qkvT[0 * D_MODEL:1 * D_MODEL].reshape(NHEAD, HEADDIM, NTOK)   # (H, E, N)
    k3 = qkvT[1 * D_MODEL:2 * D_MODEL].reshape(NHEAD, HEADDIM, NTOK)
    v3 = qkvT[2 * D_MODEL:3 * D_MODEL].reshape(NHEAD, HEADDIM, NTOK)

    # Only q needs the (H, N, E) layout; k and v feed the matmuls directly.
    qh = jnp.swapaxes(q3, 1, 2).astype(bf16)                  # (H, N, E)

    # Head-batched scores; cross-batch pairs masked with the precomputed
    # additive mask (all score/softmax math stays in f32).
    s = jnp.einsum('hne,hem->hnm', qh, k3.astype(bf16),
                   preferred_element_type=f32)                # (H, NTOK, NTOK)
    s = s + mask                                              # broadcast over heads

    m = jnp.max(s, axis=-1, keepdims=True)
    e = jnp.exp(s - m)
    l = jnp.sum(e, axis=-1, keepdims=True)                    # (H, NTOK, 1)
    o3 = jnp.einsum('hnm,hem->hne', e.astype(bf16), v3.astype(bf16),
                    preferred_element_type=f32)               # (H, NTOK, E)
    o3 = o3 * pl.reciprocal(l, approx=True)                   # deferred normalization (EUP)

    # Output projection: one batched matmul then sum over heads.
    attn = jnp.einsum('hne,hef->hnf', o3.astype(bf16), wprojH,
                      preferred_element_type=f32).sum(axis=0) + bproj   # (NTOK, D)
    x1 = x + attn

    # ---------------- MLP branch ----------------
    # Dropout(0.1) layers are identity in eval mode.
    x1n = _layernorm(x1, ln2_g, ln2_b)
    h1 = jnp.dot(x1n.astype(bf16), w1_ref[...],
                 preferred_element_type=f32) + b1             # (NTOK, HIDDEN)
    h1 = _gelu_exact(h1)
    h2 = jnp.dot(h1.astype(bf16), w2,
                 preferred_element_type=f32) + b2             # (NTOK, D)

    out_ref[...] = x1 + h2


def make_params(key):
    ks = jax.random.split(key, 12)
    w = lambda k, s: (0.02 * jax.random.normal(k, s, jnp.float32))
    params = dict(
        ln1_g=1.0 + 0.1 * jax.random.normal(ks[0], (1, D_MODEL), jnp.float32),
        ln1_b=0.1 * jax.random.normal(ks[1], (1, D_MODEL), jnp.float32),
        wqkv=w(ks[2], (D_MODEL, 3 * D_MODEL)),
        bqkv=w(ks[3], (1, 3 * D_MODEL)),
        wproj=w(ks[4], (D_MODEL, D_MODEL)),
        bproj=w(ks[5], (1, D_MODEL)),
        ln2_g=1.0 + 0.1 * jax.random.normal(ks[6], (1, D_MODEL), jnp.float32),
        ln2_b=0.1 * jax.random.normal(ks[7], (1, D_MODEL), jnp.float32),
        w1=w(ks[8], (D_MODEL, HIDDEN)),
        b1=w(ks[9], (1, HIDDEN)),
        w2=w(ks[10], (HIDDEN, D_MODEL)),
        b2=w(ks[11], (1, D_MODEL)),
    )
    return params


def transformer_block(x, params):
    B, N, D = x.shape
    assert (B, N, D) == (BATCH, SEQ, D_MODEL)
    bf16 = jnp.bfloat16

    # ---- wrapper-side (free) packing / pre-transposition of parameters ----
    # attention SCALE is folded into the q rows of wqkv^T and the q bias.
    qkv_scale = jnp.concatenate(
        [jnp.full((D_MODEL, 1), SCALE, jnp.float32),
         jnp.ones((2 * D_MODEL, 1), jnp.float32)], axis=0)           # (96, 1)

    wqkvT = params["wqkv"].T * qkv_scale                             # (96, 32) f32
    wslab = jnp.concatenate(
        [wqkvT, params["wproj"], params["w2"]], axis=0).astype(bf16)  # (256, 32) bf16

    w1 = params["w1"].astype(bf16)                                   # (32, 128) bf16

    bqkvT_b = jnp.broadcast_to(
        params["bqkv"].reshape(3 * D_MODEL, 1) * qkv_scale,
        (3 * D_MODEL, NTOK))                                         # (96, 16) f32

    tok = jnp.arange(NTOK, dtype=jnp.int32) // SEQ
    mask = jnp.where(tok[:, None] == tok[None, :], 0.0, NEG_INF).astype(jnp.float32)

    p32 = jnp.zeros((P32_ROWS, D_MODEL), jnp.float32)
    p32 = p32.at[_ROW_BQKV:_ROW_BQKV + 3 * D_MODEL, 0:NTOK].set(bqkvT_b)
    p32 = p32.at[_ROW_MASK:_ROW_MASK + NTOK, 0:NTOK].set(mask)
    p32 = p32.at[_ROW_LN1G].set(params["ln1_g"][0])
    p32 = p32.at[_ROW_LN1B].set(params["ln1_b"][0])
    p32 = p32.at[_ROW_LN2G].set(params["ln2_g"][0])
    p32 = p32.at[_ROW_LN2B].set(params["ln2_b"][0])
    p32 = p32.at[_ROW_BPROJ].set(params["bproj"][0])
    p32 = p32.at[_ROW_B2].set(params["b2"][0])
    p32 = p32.at[_ROW_B1:_ROW_B1 + _B1_ROWS].set(
        params["b1"].reshape(_B1_ROWS, D_MODEL))

    x2 = x.reshape(B * N, D)

    out2 = pl.pallas_call(
        transformer_block_kernel,
        out_shape=jax.ShapeDtypeStruct((B * N, D), jnp.float32),
        grid_spec=pltpu.PrefetchScalarGridSpec(
            num_scalar_prefetch=0,
            grid=(1,),   # single step: whole block + packed weights fit in VMEM
            in_specs=[
                pl.BlockSpec((B * N, D), lambda i: (0, 0)),
                pl.BlockSpec((WSLAB_ROWS, D), lambda i: (0, 0)),
                pl.BlockSpec((D, HIDDEN), lambda i: (0, 0)),
                pl.BlockSpec((P32_ROWS, D), lambda i: (0, 0)),
            ],
            out_specs=pl.BlockSpec((B * N, D), lambda i: (0, 0)),
        ),
        compiler_params=pltpu.CompilerParams(
            dimension_semantics=("arbitrary",)),
    )(x2, wslab, w1, p32)
    return out2.reshape(B, N, D)


def transformer_block_ref(x, params):
    """Pure-JAX reference matching the PyTorch forward (eval mode), f32."""
    p = params
    B, N, D = x.shape

    def ln(z, g, b):
        mu = z.mean(-1, keepdims=True)
        var = ((z - mu) ** 2).mean(-1, keepdims=True)
        return (z - mu) / jnp.sqrt(var + LN_EPS) * g + b

    xn = ln(x, p["ln1_g"], p["ln1_b"])
    qkv = xn @ p["wqkv"] + p["bqkv"]
    qkv = qkv.reshape(B, N, 3, NHEAD, HEADDIM).transpose(2, 0, 3, 1, 4)
    q, k, v = qkv[0], qkv[1], qkv[2]
    q = q * SCALE
    attn = jax.nn.softmax(q @ jnp.swapaxes(k, -2, -1), axis=-1)
    o = (attn @ v).transpose(0, 2, 1, 3).reshape(B, N, D)
    o = o @ p["wproj"] + p["bproj"]
    x1 = x + o

    x1n = ln(x1, p["ln2_g"], p["ln2_b"])
    h = x1n @ p["w1"] + p["b1"]
    h = 0.5 * h * (1.0 + jax.lax.erf(h * 0.7071067811865476))
    return x1 + h @ p["w2"] + p["b2"]


if __name__ == "__main__":
    key = jax.random.PRNGKey(0)
    kx, kp = jax.random.split(key)
    x = jax.random.normal(kx, (BATCH, SEQ, D_MODEL), jnp.float32)
    params = make_params(kp)

    out = transformer_block(x, params)
    out = jax.block_until_ready(out)

    ref = jax.block_until_ready(transformer_block_ref(x, params))
    assert out.shape == (BATCH, SEQ, D_MODEL)
    assert jnp.allclose(out, ref, rtol=1e-2, atol=1e-2), "mismatch vs reference"

    print("KERNEL_OK")
</pallas_src>

<mosaic_0001>
module attributes {stable_mosaic.version = 11 : i64} {
  func.func @transformer_block_kernel(%arg0: i32, %arg1: memref<16x32xf32, #tpu.memory_space<vmem>>, %arg2: memref<256x32xbf16, #tpu.memory_space<vmem>>, %arg3: memref<32x128xbf16, #tpu.memory_space<vmem>>, %arg4: memref<128x32xf32, #tpu.memory_space<vmem>>, %arg5: memref<16x32xf32, #tpu.memory_space<vmem>>) attributes {dimension_semantics = [#tpu.dimension_semantics<arbitrary>], iteration_bounds = array<i64: 1>, scalar_prefetch = 0 : i64, scratch_operands = 0 : i64, tpu.core_type = #tpu.core_type<tc>, window_params = [{pipeline_mode = #tpu.pipeline_mode<synchronous>, transform_indices = @transform_0, window_bounds = array<i64: 16, 32>}, {pipeline_mode = #tpu.pipeline_mode<synchronous>, transform_indices = @transform_1, window_bounds = array<i64: 256, 32>}, {pipeline_mode = #tpu.pipeline_mode<synchronous>, transform_indices = @transform_2, window_bounds = array<i64: 32, 128>}, {pipeline_mode = #tpu.pipeline_mode<synchronous>, transform_indices = @transform_3, window_bounds = array<i64: 128, 32>}, {pipeline_mode = #tpu.pipeline_mode<synchronous>, transform_indices = @transform_4, window_bounds = array<i64: 16, 32>}]} {
    %c0 = arith.constant 0 : index
    %c0_0 = arith.constant 0 : index
    %0 = vector.load %arg1[%c0, %c0_0] : memref<16x32xf32, #tpu.memory_space<vmem>>, vector<16x32xf32>
    %c0_1 = arith.constant 0 : index
    %c0_2 = arith.constant 0 : index
    %1 = vector.load %arg4[%c0_1, %c0_2] : memref<128x32xf32, #tpu.memory_space<vmem>>, vector<128x32xf32>
    %c0_3 = arith.constant 0 : index
    %c0_4 = arith.constant 0 : index
    %2 = vector.load %arg2[%c0_3, %c0_4] : memref<256x32xbf16, #tpu.memory_space<vmem>>, vector<256x32xbf16>
    %3 = vector.extract_strided_slice %1 {offsets = [0, 0], sizes = [96, 16], strides = [1, 1]} : vector<128x32xf32> to vector<96x16xf32>
    %4 = vector.extract_strided_slice %1 {offsets = [96, 0], sizes = [16, 16], strides = [1, 1]} : vector<128x32xf32> to vector<16x16xf32>
    %5 = vector.extract_strided_slice %1 {offsets = [112, 0], sizes = [1, 32], strides = [1, 1]} : vector<128x32xf32> to vector<1x32xf32>
    %6 = vector.extract_strided_slice %1 {offsets = [113, 0], sizes = [1, 32], strides = [1, 1]} : vector<128x32xf32> to vector<1x32xf32>
    %7 = vector.extract_strided_slice %1 {offsets = [114, 0], sizes = [1, 32], strides = [1, 1]} : vector<128x32xf32> to vector<1x32xf32>
    %8 = vector.extract_strided_slice %1 {offsets = [115, 0], sizes = [1, 32], strides = [1, 1]} : vector<128x32xf32> to vector<1x32xf32>
    %9 = vector.extract_strided_slice %1 {offsets = [116, 0], sizes = [1, 32], strides = [1, 1]} : vector<128x32xf32> to vector<1x32xf32>
    %10 = vector.extract_strided_slice %1 {offsets = [117, 0], sizes = [1, 32], strides = [1, 1]} : vector<128x32xf32> to vector<1x32xf32>
    %11 = vector.extract_strided_slice %1 {offsets = [118, 0], sizes = [1, 32], strides = [1, 1]} : vector<128x32xf32> to vector<1x32xf32>
    %12 = vector.extract_strided_slice %1 {offsets = [119, 0], sizes = [1, 32], strides = [1, 1]} : vector<128x32xf32> to vector<1x32xf32>
    %13 = vector.extract_strided_slice %1 {offsets = [120, 0], sizes = [1, 32], strides = [1, 1]} : vector<128x32xf32> to vector<1x32xf32>
    %14 = vector.extract_strided_slice %1 {offsets = [121, 0], sizes = [1, 32], strides = [1, 1]} : vector<128x32xf32> to vector<1x32xf32>
    %15 = tpu.concatenate %11, %12, %13, %14 in 1 : vector<1x32xf32>, vector<1x32xf32>, vector<1x32xf32>, vector<1x32xf32> -> vector<1x128xf32>
    %16 = vector.extract_strided_slice %2 {offsets = [0, 0], sizes = [96, 32], strides = [1, 1]} : vector<256x32xbf16> to vector<96x32xbf16>
    %17 = vector.extract_strided_slice %2 {offsets = [96, 0], sizes = [32, 32], strides = [1, 1]} : vector<256x32xbf16> to vector<32x32xbf16>
    %18 = vector.shape_cast %17 : vector<32x32xbf16> to vector<4x8x32xbf16>
    %19 = vector.extract_strided_slice %2 {offsets = [128, 0], sizes = [128, 32], strides = [1, 1]} : vector<256x32xbf16> to vector<128x32xbf16>
    %cst = arith.constant dense<0.000000e+00> : vector<16xf32>
    %20 = vector.multi_reduction <add>, %0, %cst [1] : vector<16x32xf32> to vector<16xf32>
    %21 = vector.shape_cast %20 : vector<16xf32> to vector<16x1xf32>
    %cst_5 = arith.constant 3.200000e+01 : f32
    %22 = vector.broadcast %cst_5 : f32 to vector<16x1xf32>
    %23 = arith.divf %21, %22 : vector<16x1xf32>
    %24 = vector.broadcast %23 : vector<16x1xf32> to vector<16x32xf32>
    %25 = arith.subf %0, %24 : vector<16x32xf32>
    %26 = arith.mulf %25, %25 : vector<16x32xf32>
    %cst_6 = arith.constant dense<0.000000e+00> : vector<16xf32>
    %27 = vector.multi_reduction <add>, %26, %cst_6 [1] : vector<16x32xf32> to vector<16xf32>
    %28 = vector.shape_cast %27 : vector<16xf32> to vector<16x1xf32>
    %cst_7 = arith.constant 3.200000e+01 : f32
    %29 = vector.broadcast %cst_7 : f32 to vector<16x1xf32>
    %30 = arith.divf %28, %29 : vector<16x1xf32>
    %cst_8 = arith.constant 9.99999974E-6 : f32
    %31 = vector.broadcast %cst_8 : f32 to vector<16x1xf32>
    %32 = arith.addf %30, %31 : vector<16x1xf32>
    %33 = math.rsqrt %32 : vector<16x1xf32>
    %34 = vector.broadcast %23 : vector<16x1xf32> to vector<16x32xf32>
    %35 = arith.subf %0, %34 : vector<16x32xf32>
    %36 = vector.broadcast %33 : vector<16x1xf32> to vector<16x32xf32>
    %37 = arith.mulf %35, %36 : vector<16x32xf32>
    %38 = vector.broadcast %5 : vector<1x32xf32> to vector<16x32xf32>
    %39 = arith.mulf %37, %38 : vector<16x32xf32>
    %40 = vector.broadcast %6 : vector<1x32xf32> to vector<16x32xf32>
    %41 = arith.addf %39, %40 : vector<16x32xf32>
    %42 = arith.truncf %41 : vector<16x32xf32> to vector<16x32xbf16>
    "tpu.trace_start"() <{level = 10 : i32, message = "kd,nd->kn"}> : () -> ()
    %cst_9 = arith.constant dense<0.000000e+00> : vector<96x16xf32>
    %43 = tpu.matmul %16, %42, %cst_9 {dimension_numbers = #tpu.dot_dimension_numbers<[1], [1], [0], [0], [0, 0, 1, 0], [], []>} : vector<96x32xbf16>, vector<16x32xbf16>, vector<96x16xf32> -> vector<96x16xf32>
    "tpu.trace_stop"() : () -> ()
    %44 = arith.addf %43, %3 : vector<96x16xf32>
    %45 = vector.extract_strided_slice %44 {offsets = [0, 0], sizes = [32, 16], strides = [1, 1]} : vector<96x16xf32> to vector<32x16xf32>
    %46 = vector.shape_cast %45 : vector<32x16xf32> to vector<4x8x16xf32>
    %47 = vector.extract_strided_slice %44 {offsets = [32, 0], sizes = [32, 16], strides = [1, 1]} : vector<96x16xf32> to vector<32x16xf32>
    %48 = vector.shape_cast %47 : vector<32x16xf32> to vector<4x8x16xf32>
    %49 = vector.extract_strided_slice %44 {offsets = [64, 0], sizes = [32, 16], strides = [1, 1]} : vector<96x16xf32> to vector<32x16xf32>
    %50 = vector.shape_cast %49 : vector<32x16xf32> to vector<4x8x16xf32>
    %51 = tpu.transpose %46, [0, 2, 1] : vector<4x8x16xf32> -> vector<4x16x8xf32>
    %52 = arith.truncf %51 : vector<4x16x8xf32> to vector<4x16x8xbf16>
    %53 = arith.truncf %48 : vector<4x8x16xf32> to vector<4x8x16xbf16>
    "tpu.trace_start"() <{level = 10 : i32, message = "hne,hem->hnm"}> : () -> ()
    %cst_10 = arith.constant dense<0.000000e+00> : vector<4x16x16xf32>
    %54 = tpu.matmul %52, %53, %cst_10 {dimension_numbers = #tpu.dot_dimension_numbers<[2], [1], [1], [2], [0, 0, 0, 1, 1, 2], [0], [0]>} : vector<4x16x8xbf16>, vector<4x8x16xbf16>, vector<4x16x16xf32> -> vector<4x16x16xf32>
    "tpu.trace_stop"() : () -> ()
    %55 = vector.shape_cast %4 : vector<16x16xf32> to vector<1x16x16xf32>
    %56 = vector.broadcast %55 : vector<1x16x16xf32> to vector<4x16x16xf32>
    %57 = arith.addf %54, %56 : vector<4x16x16xf32>
    %cst_11 = arith.constant dense<0xFF800000> : vector<4x16xf32>
    %58 = vector.multi_reduction <maximumf>, %57, %cst_11 [2] : vector<4x16x16xf32> to vector<4x16xf32>
    %59 = vector.shape_cast %58 : vector<4x16xf32> to vector<4x16x1xf32>
    %60 = vector.broadcast %59 : vector<4x16x1xf32> to vector<4x16x16xf32>
    %61 = arith.subf %57, %60 : vector<4x16x16xf32>
    %62 = math.exp %61 : vector<4x16x16xf32>
    %cst_12 = arith.constant dense<0.000000e+00> : vector<4x16xf32>
    %63 = vector.multi_reduction <add>, %62, %cst_12 [2] : vector<4x16x16xf32> to vector<4x16xf32>
    %64 = vector.shape_cast %63 : vector<4x16xf32> to vector<4x16x1xf32>
    %65 = arith.truncf %62 : vector<4x16x16xf32> to vector<4x16x16xbf16>
    %66 = arith.truncf %50 : vector<4x8x16xf32> to vector<4x8x16xbf16>
    "tpu.trace_start"() <{level = 10 : i32, message = "hnm,hem->hne"}> : () -> ()
    %cst_13 = arith.constant dense<0.000000e+00> : vector<4x16x8xf32>
    %67 = tpu.matmul %65, %66, %cst_13 {dimension_numbers = #tpu.dot_dimension_numbers<[2], [2], [1], [1], [0, 0, 0, 1, 1, 1], [0], [0]>} : vector<4x16x16xbf16>, vector<4x8x16xbf16>, vector<4x16x8xf32> -> vector<4x16x8xf32>
    "tpu.trace_stop"() : () -> ()
    %68 = tpu.reciprocal %64 {approx = true} : vector<4x16x1xf32> -> vector<4x16x1xf32>
    %69 = vector.broadcast %68 : vector<4x16x1xf32> to vector<4x16x8xf32>
    %70 = arith.mulf %67, %69 : vector<4x16x8xf32>
    %71 = arith.truncf %70 : vector<4x16x8xf32> to vector<4x16x8xbf16>
    "tpu.trace_start"() <{level = 10 : i32, message = "hne,hef->hnf"}> : () -> ()
    %cst_14 = arith.constant dense<0.000000e+00> : vector<4x16x32xf32>
    %72 = tpu.matmul %71, %18, %cst_14 {dimension_numbers = #tpu.dot_dimension_numbers<[2], [1], [1], [2], [0, 0, 0, 1, 1, 2], [0], [0]>} : vector<4x16x8xbf16>, vector<4x8x32xbf16>, vector<4x16x32xf32> -> vector<4x16x32xf32>
    "tpu.trace_stop"() : () -> ()
    %cst_15 = arith.constant dense<0.000000e+00> : vector<16x32xf32>
    %73 = vector.multi_reduction <add>, %72, %cst_15 [0] : vector<4x16x32xf32> to vector<16x32xf32>
    %74 = vector.broadcast %9 : vector<1x32xf32> to vector<16x32xf32>
    %75 = arith.addf %73, %74 : vector<16x32xf32>
    %76 = arith.addf %0, %75 : vector<16x32xf32>
    %cst_16 = arith.constant dense<0.000000e+00> : vector<16xf32>
    %77 = vector.multi_reduction <add>, %76, %cst_16 [1] : vector<16x32xf32> to vector<16xf32>
    %78 = vector.shape_cast %77 : vector<16xf32> to vector<16x1xf32>
    %cst_17 = arith.constant 3.200000e+01 : f32
    %79 = vector.broadcast %cst_17 : f32 to vector<16x1xf32>
    %80 = arith.divf %78, %79 : vector<16x1xf32>
    %81 = vector.broadcast %80 : vector<16x1xf32> to vector<16x32xf32>
    %82 = arith.subf %76, %81 : vector<16x32xf32>
    %83 = arith.mulf %82, %82 : vector<16x32xf32>
    %cst_18 = arith.constant dense<0.000000e+00> : vector<16xf32>
    %84 = vector.multi_reduction <add>, %83, %cst_18 [1] : vector<16x32xf32> to vector<16xf32>
    %85 = vector.shape_cast %84 : vector<16xf32> to vector<16x1xf32>
    %cst_19 = arith.constant 3.200000e+01 : f32
    %86 = vector.broadcast %cst_19 : f32 to vector<16x1xf32>
    %87 = arith.divf %85, %86 : vector<16x1xf32>
    %cst_20 = arith.constant 9.99999974E-6 : f32
    %88 = vector.broadcast %cst_20 : f32 to vector<16x1xf32>
    %89 = arith.addf %87, %88 : vector<16x1xf32>
    %90 = math.rsqrt %89 : vector<16x1xf32>
    %91 = vector.broadcast %80 : vector<16x1xf32> to vector<16x32xf32>
    %92 = arith.subf %76, %91 : vector<16x32xf32>
    %93 = vector.broadcast %90 : vector<16x1xf32> to vector<16x32xf32>
    %94 = arith.mulf %92, %93 : vector<16x32xf32>
    %95 = vector.broadcast %7 : vector<1x32xf32> to vector<16x32xf32>
    %96 = arith.mulf %94, %95 : vector<16x32xf32>
    %97 = vector.broadcast %8 : vector<1x32xf32> to vector<16x32xf32>
    %98 = arith.addf %96, %97 : vector<16x32xf32>
    %99 = arith.truncf %98 : vector<16x32xf32> to vector<16x32xbf16>
    %c0_21 = arith.constant 0 : index
    %c0_22 = arith.constant 0 : index
    %100 = vector.load %arg3[%c0_21, %c0_22] : memref<32x128xbf16, #tpu.memory_space<vmem>>, vector<32x128xbf16>
    %cst_23 = arith.constant dense<0.000000e+00> : vector<16x128xf32>
    %101 = tpu.matmul %99, %100, %cst_23 {dimension_numbers = #tpu.dot_dimension_numbers<[1], [0], [0], [1], [0, 0, 1, 1], [], []>} : vector<16x32xbf16>, vector<32x128xbf16>, vector<16x128xf32> -> vector<16x128xf32>
    %102 = vector.broadcast %15 : vector<1x128xf32> to vector<16x128xf32>
    %103 = arith.addf %101, %102 : vector<16x128xf32>
    %cst_24 = arith.constant 5.000000e-01 : f32
    %104 = vector.broadcast %cst_24 : f32 to vector<16x128xf32>
    %105 = arith.mulf %104, %103 : vector<16x128xf32>
    %cst_25 = arith.constant 0.707106769 : f32
    %106 = vector.broadcast %cst_25 : f32 to vector<16x128xf32>
    %107 = arith.mulf %103, %106 : vector<16x128xf32>
    %108 = math.erf %107 : vector<16x128xf32>
    %cst_26 = arith.constant 1.000000e+00 : f32
    %109 = vector.broadcast %cst_26 : f32 to vector<16x128xf32>
    %110 = arith.addf %109, %108 : vector<16x128xf32>
    %111 = arith.mulf %105, %110 : vector<16x128xf32>
    %112 = arith.truncf %111 : vector<16x128xf32> to vector<16x128xbf16>
    %cst_27 = arith.constant dense<0.000000e+00> : vector<16x32xf32>
    %113 = tpu.matmul %112, %19, %cst_27 {dimension_numbers = #tpu.dot_dimension_numbers<[1], [0], [0], [1], [0, 0, 1, 1], [], []>} : vector<16x128xbf16>, vector<128x32xbf16>, vector<16x32xf32> -> vector<16x32xf32>
    %114 = vector.broadcast %10 : vector<1x32xf32> to vector<16x32xf32>
    %115 = arith.addf %113, %114 : vector<16x32xf32>
    %116 = arith.addf %76, %115 : vector<16x32xf32>
    %c0_28 = arith.constant 0 : index
    %c0_29 = arith.constant 0 : index
    %117 = vector.load %arg5[%c0_28, %c0_29] : memref<16x32xf32, #tpu.memory_space<vmem>>, vector<16x32xf32>
    tpu.vector_store %arg5[%c0_28, %c0_29], %116 {strides = array<i32>} : memref<16x32xf32, #tpu.memory_space<vmem>>, vector<16x32xf32>,
    return
  }
  func.func @transform_0(%arg0: i32) -> (i32, i32) {
    %c0_i32 = arith.constant 0 : i32
    %c0_i32_0 = arith.constant 0 : i32
    %c0_i32_1 = arith.constant 0 : i32
    return %c0_i32, %c0_i32_0 : i32, i32
  }
  func.func @transform_1(%arg0: i32) -> (i32, i32) {
    %c0_i32 = arith.constant 0 : i32
    %c0_i32_0 = arith.constant 0 : i32
    %c0_i32_1 = arith.constant 0 : i32
    return %c0_i32, %c0_i32_0 : i32, i32
  }
  func.func @transform_2(%arg0: i32) -> (i32, i32) {
    %c0_i32 = arith.constant 0 : i32
    %c0_i32_0 = arith.constant 0 : i32
    %c0_i32_1 = arith.constant 0 : i32
    return %c0_i32, %c0_i32_0 : i32, i32
  }
  func.func @transform_3(%arg0: i32) -> (i32, i32) {
    %c0_i32 = arith.constant 0 : i32
    %c0_i32_0 = arith.constant 0 : i32
    %c0_i32_1 = arith.constant 0 : i32
    return %c0_i32, %c0_i32_0 : i32, i32
  }
  func.func @transform_4(%arg0: i32) -> (i32, i32) {
    %c0_i32 = arith.constant 0 : i32
    %c0_i32_0 = arith.constant 0 : i32
    %c0_i32_1 = arith.constant 0 : i32
    return %c0_i32, %c0_i32_0 : i32, i32
  }
}

</mosaic_0001>

<llo_original>
// kernel: tpu_custom_call.1
$region0: #{tpu_custom_call.1}
  #allocation0 [shape = 'u32[]', space=smem, size = 0x4, offset = 0x4, fixed_abs, tag = 'smem constant byte address 0x4 - core index']
  #allocation1 [shape = 'u32[72,128]{1,0:T(1,128)}', space=vmem, size = 0x9000, scoped, tag = 'internal scratch']
  %s0 = inlined_call_operand.vmem [shape: f32[16,32], index: 0, kind: input, shape index: {}]
  %s1 = inlined_call_operand.vmem [shape: bf16[256,32], index: 1, kind: input, shape index: {}]
  %s2 = inlined_call_operand.vmem [shape: bf16[32,128], index: 2, kind: input, shape index: {}]
  %s3 = inlined_call_operand.vmem [shape: f32[128,32], index: 3, kind: input, shape index: {}]
  %s4 = inlined_call_operand.hbm [shape: f32[16,32], index: 4, kind: output, shape index: {}]
  %s5 = sld [smem:[#allocation0]]
  $region26: #{tpu_custom_call.1} parent=0
    _
  %s7 = ssub.s32 1, %s5
  %s8 = scalar_select 0, %s7, %s5
  $region1: #{tpu_custom_call.1} parent=0
    #allocation2 [shape = 'u8[8192]{0}', space=vmem, size = 0x2000, scoped, tag = 'output window, operand 0, single buffered']
    #allocation3 [shape = 's32[1]{0}', space=sflag, size = 0x4, scoped, tag = 'scoped memory for tpu_custom_call.1']
    %9 = vsyncpa [#allocation3], 0
    // Predicated region
    $region2: #{tpu_custom_call.1} parent=1 // pred_check
      _
    $region3: #{tpu_custom_call.1} parent=1 // pred_check_branch
      %11 = sbr.rel (0) target = $region5
    $region4: #{tpu_custom_call.1} parent=1 // pred_region
      _
    $region5: #{tpu_custom_call.1} parent=1 // pred_fallthru
      _
    // Predicated region
    $region6: #{tpu_custom_call.1} parent=1 // pred_check
      _
    $region7: #{tpu_custom_call.1} parent=1 // pred_check_branch
      %13 = sbr.rel (0) target = $region9
    $region8: #{tpu_custom_call.1} parent=1 // pred_region
      _
    $region9: #{tpu_custom_call.1} parent=1 // pred_fallthru
      _
    // Predicated region
    $region10: #{tpu_custom_call.1} parent=1 // pred_check
      _
    $region11: #{tpu_custom_call.1} parent=1 // pred_check_branch
      %15 = sbr.rel (0) target = $region13
    $region12: #{tpu_custom_call.1} parent=1 // pred_region
      _
    $region13: #{tpu_custom_call.1} parent=1 // pred_fallthru
      _
    // Predicated region
    $region14: #{tpu_custom_call.1} parent=1 // pred_check
      _
    $region15: #{tpu_custom_call.1} parent=1 // pred_check_branch
      %17 = sbr.rel (0) target = $region17
    $region16: #{tpu_custom_call.1} parent=1 // pred_region
      _
    $region17: #{tpu_custom_call.1} parent=1 // pred_fallthru
      _
    %v19 = vld [vmem:[%s0] sm:$0xff]
    %v20 = vld [vmem:[%s0 + $0x8] sm:$0xff]
    %v21 = vld [vmem:[%s3] sm:$0xff]
    %v22 = vld [vmem:[%s3 + $0x8] sm:$0xff]
    %v23 = vld [vmem:[%s3 + $0x10] sm:$0xff]
    %v24 = vld [vmem:[%s3 + $0x18] sm:$0xff]
    %v25 = vld [vmem:[%s3 + $0x20] sm:$0xff]
    %v26 = vld [vmem:[%s3 + $0x28] sm:$0xff]
    %v27 = vld [vmem:[%s3 + $0x30] sm:$0xff]
    %v28 = vld [vmem:[%s3 + $0x38] sm:$0xff]
    %v29 = vld [vmem:[%s3 + $0x40] sm:$0xff]
    %v30 = vld [vmem:[%s3 + $0x48] sm:$0xff]
    %v31 = vld [vmem:[%s3 + $0x50] sm:$0xff]
    %v32 = vld [vmem:[%s3 + $0x58] sm:$0xff]
    %v33 = vld [vmem:[%s3 + $0x60] sm:$0xff]
    %v34 = vld [vmem:[%s3 + $0x68] sm:$0xff]
    %v35 = vld [vmem:[%s3 + $0x70] sm:$0xff]
    %v36 = vld [vmem:[%s3 + $0x78] sm:$0xff]
    %v37 = vld [vmem:[%s1] sm:$0xf]
    %v38 = vld [vmem:[%s1 + $0x4] sm:$0xf]
    %v39 = vld [vmem:[%s1 + $0x8] sm:$0xf]
    %v40 = vld [vmem:[%s1 + $0xc] sm:$0xf]
    %v41 = vld [vmem:[%s1 + $0x10] sm:$0xf]
    %v42 = vld [vmem:[%s1 + $0x14] sm:$0xf]
    %v43 = vld [vmem:[%s1 + $0x18] sm:$0xf]
    %v44 = vld [vmem:[%s1 + $0x1c] sm:$0xf]
    %v45 = vld [vmem:[%s1 + $0x20] sm:$0xf]
    %v46 = vld [vmem:[%s1 + $0x24] sm:$0xf]
    %v47 = vld [vmem:[%s1 + $0x28] sm:$0xf]
    %v48 = vld [vmem:[%s1 + $0x2c] sm:$0xf]
    %v49 = vld [vmem:[%s1 + $0x30] sm:$0xf]
    %v50 = vld [vmem:[%s1 + $0x34] sm:$0xf]
    %v51 = vld [vmem:[%s1 + $0x38] sm:$0xf]
    %v52 = vld [vmem:[%s1 + $0x3c] sm:$0xf]
    %v53 = vld [vmem:[%s1 + $0x40] sm:$0xf]
    %v54 = vld [vmem:[%s1 + $0x44] sm:$0xf]
    %v55 = vld [vmem:[%s1 + $0x48] sm:$0xf]
    %v56 = vld [vmem:[%s1 + $0x4c] sm:$0xf]
    %v57 = vld [vmem:[%s1 + $0x50] sm:$0xf]
    %v58 = vld [vmem:[%s1 + $0x54] sm:$0xf]
    %v59 = vld [vmem:[%s1 + $0x58] sm:$0xf]
    %v60 = vld [vmem:[%s1 + $0x5c] sm:$0xf]
    %v61 = vld [vmem:[%s1 + $0x60] sm:$0xf]
    %v62 = vld [vmem:[%s1 + $0x64] sm:$0xf]
    %v63 = vld [vmem:[%s1 + $0x68] sm:$0xf]
    %v64 = vld [vmem:[%s1 + $0x6c] sm:$0xf]
    %v65 = vld [vmem:[%s1 + $0x70] sm:$0xf]
    %v66 = vld [vmem:[%s1 + $0x74] sm:$0xf]
    %v67 = vld [vmem:[%s1 + $0x78] sm:$0xf]
    %v68 = vld [vmem:[%s1 + $0x7c] sm:$0xf]
    %v70 = vrot.slane %v35, 1
    %71 = vrot.lane.b32.xlu0 %v70, 32
    %v72 = vpop.permute.xlu0 %71
    %v75 = vrot.slane %v36, 2
    %76 = vrot.lane.b32.xlu0 %v75, 64
    %v77 = vpop.permute.xlu0 %76
    %v79 = vrot.slane %v36, 3
    %80 = vrot.lane.b32.xlu0 %v79, 96
    %v81 = vpop.permute.xlu0 %80
    %vm83 = vcmask 261120
    %v84 = vsel %vm83, %v35, %v72
    %vm85 = vcmask 523264
    %v86 = vsel %vm85, %v84, %v77
    %vm87 = vcmask 785408
    %v88 = vsel %vm87, %v86, %v81
    %v89 = vsel %vm83, %v19, 0.0
    %90 = vadd.xlane.f32.xlu0 %v89
    %v91 = vpop.xlane.xlu0 %90
    %v92 = vsel %vm83, %v20, 0.0
    %93 = vadd.xlane.f32.xlu0 %v92
    %v94 = vpop.xlane.xlu0 %93
    %v95 = vrcp.pop 32.0
    %v96 = vmul.f32 32.0, %v95
    %v97 = vsub.f32 1.0, %v96
    %v98 = vmul.f32 %v95, %v97
    %v99 = vadd.f32 %v95, %v98
    %vm100 = vweird.f32 %v95
    %v101 = vsel %vm100, %v95, %v99
    %v102 = vmul.f32 %v91, %v101
    %v103 = vmul.f32 %v94, %v101
    %v104 = vsub.f32 %v19, %v102
    %v105 = vsub.f32 %v20, %v103
    %v106 = vmul.f32 %v104, %v104
    %v107 = vmul.f32 %v105, %v105
    %v108 = vsel %vm83, %v106, 0.0
    %109 = vadd.xlane.f32.xlu0 %v108
    %v110 = vpop.xlane.xlu0 %109
    %v111 = vsel %vm83, %v107, 0.0
    %112 = vadd.xlane.f32.xlu0 %v111
    %v113 = vpop.xlane.xlu0 %112
    %v114 = vmul.f32 %v110, %v101
    %v115 = vmul.f32 %v113, %v101
    %v116 = vadd.f32 %v114, 1e-05
    %v117 = vadd.f32 %v115, 1e-05
    %v118 = vrsqrt.pop %v116
    %v119 = vmul.f32 %v118, %v116
    %v120 = vmul.f32 %v119, %v118
    %v121 = vmul.f32 0.5, %v120
    %v122 = vsub.f32 1.5, %v121
    %v123 = vmul.f32 %v118, %v122
    %vm124 = vweird.f32 %v116
    %vm125 = vweird.f32 %v118
    %vm126 = vmor %vm124, %vm125
    %v127 = vsel %vm126, %v118, %v123
    %v128 = vrsqrt.pop %v117
    %v129 = vmul.f32 %v128, %v117
    %v130 = vmul.f32 %v129, %v128
    %v131 = vmul.f32 0.5, %v130
    %v132 = vsub.f32 1.5, %v131
    %v133 = vmul.f32 %v128, %v132
    %vm134 = vweird.f32 %v117
    %vm135 = vweird.f32 %v128
    %vm136 = vmor %vm134, %vm135
    %v137 = vsel %vm136, %v128, %v133
    %v138 = vmul.f32 %v104, %v127
    %v139 = vmul.f32 %v105, %v137
    %v140 = vperm.slane %v35, 0
    %v141 = vmul.f32 %v138, %v140
    %v142 = vmul.f32 %v139, %v140
    %v143 = vperm.slane %v35, 1
    %v144 = vadd.f32 %v141, %v143
    %v145 = vadd.f32 %v142, %v143
    %v146 = vpack.c.bf16 %v145, %v144
    %v159 = vunpack.c.l.b16 %v37
    %v160 = vunpack.c.l.b16 %v38
    %v161 = vunpack.c.l.b16 %v39
    %v162 = vunpack.c.l.b16 %v40
    %v163 = vunpack.c.l.b16 %v41
    %v164 = vunpack.c.l.b16 %v42
    %v165 = vunpack.c.l.b16 %v43
    %v166 = vunpack.c.l.b16 %v44
    %v167 = vunpack.c.l.b16 %v45
    %v168 = vunpack.c.l.b16 %v46
    %v169 = vunpack.c.l.b16 %v47
    %v170 = vunpack.c.l.b16 %v48
    %v171 = vpack.c.b16 %v160, %v159
    %v172 = vpack.c.b16 %v162, %v161
    %v173 = vpack.c.b16 %v164, %v163
    %v174 = vpack.c.b16 %v166, %v165
    %v175 = vpack.c.b16 %v168, %v167
    %v176 = vpack.c.b16 %v170, %v169
    %v178 = vsel %vm83, %v171, 0
    %v181 = vsel %vm83, %v172, 0
    %v184 = vsel %vm83, %v173, 0
    %v187 = vsel %vm83, %v174, 0
    %v190 = vsel %vm83, %v175, 0
    %v193 = vsel %vm83, %v176, 0
    %v196 = vsel %vm83, %v146, 0
    %198 = vmatpush.bf16.xpose.msra.mxu0 0
    %199 = vmatpush.bf16.xpose.msra.mxu0 0
    %200 = vmatpush.bf16.xpose.msra.mxu0 0
    %201 = vmatpush.bf16.xpose.msra.mxu0 0
    %202 = vmatpush.bf16.xpose.msra.mxu0 0
    %203 = vmatpush.bf16.xpose.msra.mxu0 0
    %204 = vmatpush.bf16.xpose.msra.mxu0 0
    %205 = vmatpush.bf16.xpose.msra.mxu0 %v196
    %206 = vmatmul.bf16.gmra.mxu0 %v178
    %v207 = vpop.f32.mrf.mxu0
    %v208 = vadd.f32 %v21, %v207
    %v209 = vpop.f32.mrf.mxu0
    %v210 = vadd.f32 %v22, %v209
    %211 = vmatmul.bf16.gmra.mxu0 %v181
    %v212 = vpop.f32.mrf.mxu0
    %v213 = vadd.f32 %v23, %v212
    %v214 = vpop.f32.mrf.mxu0
    %v215 = vadd.f32 %v24, %v214
    %216 = vmatmul.bf16.gmra.mxu0 %v184
    %v217 = vpop.f32.mrf.mxu0
    %v218 = vadd.f32 %v25, %v217
    %v219 = vpop.f32.mrf.mxu0
    %v220 = vadd.f32 %v26, %v219
    %221 = vmatmul.bf16.gmra.mxu0 %v187
    %v222 = vpop.f32.mrf.mxu0
    %v223 = vadd.f32 %v27, %v222
    %v224 = vpop.f32.mrf.mxu0
    %v225 = vadd.f32 %v28, %v224
    %226 = vmatmul.bf16.gmra.mxu0 %v190
    %v227 = vpop.f32.mrf.mxu0
    %v228 = vadd.f32 %v29, %v227
    %v229 = vpop.f32.mrf.mxu0
    %v230 = vadd.f32 %v30, %v229
    %231 = vmatmul.bf16.gmra.mxu0 %v193
    %v232 = vpop.f32.mrf.mxu0
    %v233 = vadd.f32 %v31, %v232
    %v234 = vpop.f32.mrf.mxu0
    %v235 = vadd.f32 %v32, %v234
    %236 = vdwg.mxu0
    %237 = vxpose.xlu0.b32.start [1/16] %v208, 128
    %238 = vxpose.xlu0.b32.cont [2/16] 0.0, 128
    %239 = vxpose.xlu0.b32.cont [3/16] 0.0, 128
    %240 = vxpose.xlu0.b32.cont [4/16] 0.0, 128
    %241 = vxpose.xlu0.b32.cont [5/16] 0.0, 128
    %242 = vxpose.xlu0.b32.cont [6/16] 0.0, 128
    %243 = vxpose.xlu0.b32.cont [7/16] 0.0, 128
    %244 = vxpose.xlu0.b32.cont [8/16] 0.0, 128
    %245 = vxpose.xlu0.b32.cont [9/16] 0.0, 128
    %246 = vxpose.xlu0.b32.cont [10/16] 0.0, 128
    %247 = vxpose.xlu0.b32.cont [11/16] 0.0, 128
    %248 = vxpose.xlu0.b32.cont [12/16] 0.0, 128
    %249 = vxpose.xlu0.b32.cont [13/16] 0.0, 128
    %250 = vxpose.xlu0.b32.cont [14/16] 0.0, 128
    %251 = vxpose.xlu0.b32.cont [15/16] 0.0, 128
    %252 = vxpose.xlu0.b32.end [16/16] 0.0, 128
    %v253 = vpop.trf.xlu0
    %v254 = vpop.trf.xlu0
    %v255 = vpop.trf.xlu0
    %v256 = vpop.trf.xlu0
    %v257 = vpop.trf.xlu0
    %v258 = vpop.trf.xlu0
    %v259 = vpop.trf.xlu0
    %v260 = vpop.trf.xlu0
    %v261 = vpop.trf.xlu0
    %v262 = vpop.trf.xlu0
    %v263 = vpop.trf.xlu0
    %v264 = vpop.trf.xlu0
    %v265 = vpop.trf.xlu0
    %v266 = vpop.trf.xlu0
    %v267 = vpop.trf.xlu0
    %v268 = vpop.trf.xlu0
    %269 = vxpose.xlu0.b32.start [1/16] %v210, 128
    %270 = vxpose.xlu0.b32.cont [2/16] 0.0, 128
    %271 = vxpose.xlu0.b32.cont [3/16] 0.0, 128
    %272 = vxpose.xlu0.b32.cont [4/16] 0.0, 128
    %273 = vxpose.xlu0.b32.cont [5/16] 0.0, 128
    %274 = vxpose.xlu0.b32.cont [6/16] 0.0, 128
    %275 = vxpose.xlu0.b32.cont [7/16] 0.0, 128
    %276 = vxpose.xlu0.b32.cont [8/16] 0.0, 128
    %277 = vxpose.xlu0.b32.cont [9/16] 0.0, 128
    %278 = vxpose.xlu0.b32.cont [10/16] 0.0, 128
    %279 = vxpose.xlu0.b32.cont [11/16] 0.0, 128
    %280 = vxpose.xlu0.b32.cont [12/16] 0.0, 128
    %281 = vxpose.xlu0.b32.cont [13/16] 0.0, 128
    %282 = vxpose.xlu0.b32.cont [14/16] 0.0, 128
    %283 = vxpose.xlu0.b32.cont [15/16] 0.0, 128
    %284 = vxpose.xlu0.b32.end [16/16] 0.0, 128
    %v285 = vpop.trf.xlu0
    %v286 = vpop.trf.xlu0
    %v287 = vpop.trf.xlu0
    %v288 = vpop.trf.xlu0
    %v289 = vpop.trf.xlu0
    %v290 = vpop.trf.xlu0
    %v291 = vpop.trf.xlu0
    %v292 = vpop.trf.xlu0
    %v293 = vpop.trf.xlu0
    %v294 = vpop.trf.xlu0
    %v295 = vpop.trf.xlu0
    %v296 = vpop.trf.xlu0
    %v297 = vpop.trf.xlu0
    %v298 = vpop.trf.xlu0
    %v299 = vpop.trf.xlu0
    %v300 = vpop.trf.xlu0
    %301 = vxpose.xlu0.b32.start [1/16] %v213, 128
    %302 = vxpose.xlu0.b32.cont [2/16] 0.0, 128
    %303 = vxpose.xlu0.b32.cont [3/16] 0.0, 128
    %304 = vxpose.xlu0.b32.cont [4/16] 0.0, 128
    %305 = vxpose.xlu0.b32.cont [5/16] 0.0, 128
    %306 = vxpose.xlu0.b32.cont [6/16] 0.0, 128
    %307 = vxpose.xlu0.b32.cont [7/16] 0.0, 128
    %308 = vxpose.xlu0.b32.cont [8/16] 0.0, 128
    %309 = vxpose.xlu0.b32.cont [9/16] 0.0, 128
    %310 = vxpose.xlu0.b32.cont [10/16] 0.0, 128
    %311 = vxpose.xlu0.b32.cont [11/16] 0.0, 128
    %312 = vxpose.xlu0.b32.cont [12/16] 0.0, 128
    %313 = vxpose.xlu0.b32.cont [13/16] 0.0, 128
    %314 = vxpose.xlu0.b32.cont [14/16] 0.0, 128
    %315 = vxpose.xlu0.b32.cont [15/16] 0.0, 128
    %316 = vxpose.xlu0.b32.end [16/16] 0.0, 128
    %v317 = vpop.trf.xlu0
    %v318 = vpop.trf.xlu0
    %v319 = vpop.trf.xlu0
    %v320 = vpop.trf.xlu0
    %v321 = vpop.trf.xlu0
    %v322 = vpop.trf.xlu0
    %v323 = vpop.trf.xlu0
    %v324 = vpop.trf.xlu0
    %v325 = vpop.trf.xlu0
    %v326 = vpop.trf.xlu0
    %v327 = vpop.trf.xlu0
    %v328 = vpop.trf.xlu0
    %v329 = vpop.trf.xlu0
    %v330 = vpop.trf.xlu0
    %v331 = vpop.trf.xlu0
    %v332 = vpop.trf.xlu0
    %333 = vxpose.xlu0.b32.start [1/16] %v215, 128
    %334 = vxpose.xlu0.b32.cont [2/16] 0.0, 128
    %335 = vxpose.xlu0.b32.cont [3/16] 0.0, 128
    %336 = vxpose.xlu0.b32.cont [4/16] 0.0, 128
    %337 = vxpose.xlu0.b32.cont [5/16] 0.0, 128
    %338 = vxpose.xlu0.b32.cont [6/16] 0.0, 128
    %339 = vxpose.xlu0.b32.cont [7/16] 0.0, 128
    %340 = vxpose.xlu0.b32.cont [8/16] 0.0, 128
    %341 = vxpose.xlu0.b32.cont [9/16] 0.0, 128
    %342 = vxpose.xlu0.b32.cont [10/16] 0.0, 128
    %343 = vxpose.xlu0.b32.cont [11/16] 0.0, 128
    %344 = vxpose.xlu0.b32.cont [12/16] 0.0, 128
    %345 = vxpose.xlu0.b32.cont [13/16] 0.0, 128
    %346 = vxpose.xlu0.b32.cont [14/16] 0.0, 128
    %347 = vxpose.xlu0.b32.cont [15/16] 0.0, 128
    %348 = vxpose.xlu0.b32.end [16/16] 0.0, 128
    %v349 = vpop.trf.xlu0
    %v350 = vpop.trf.xlu0
    %v351 = vpop.trf.xlu0
    %v352 = vpop.trf.xlu0
    %v353 = vpop.trf.xlu0
    %v354 = vpop.trf.xlu0
    %v355 = vpop.trf.xlu0
    %v356 = vpop.trf.xlu0
    %v357 = vpop.trf.xlu0
    %v358 = vpop.trf.xlu0
    %v359 = vpop.trf.xlu0
    %v360 = vpop.trf.xlu0
    %v361 = vpop.trf.xlu0
    %v362 = vpop.trf.xlu0
    %v363 = vpop.trf.xlu0
    %v364 = vpop.trf.xlu0
    %v365 = vpack.c.bf16 %v253, %v253
    %v366 = vpack.c.bf16 %v254, %v254
    %v367 = vpack.c.bf16 %v285, %v285
    %v368 = vpack.c.bf16 %v286, %v286
    %v369 = vpack.c.bf16 %v317, %v317
    %v370 = vpack.c.bf16 %v318, %v318
    %v371 = vpack.c.bf16 %v349, %v349
    %v372 = vpack.c.bf16 %v350, %v350
    %v373 = vpack.c.bf16 %v218, %v218
    %v374 = vpack.c.bf16 %v220, %v220
    %v375 = vpack.c.bf16 %v223, %v223
    %v376 = vpack.c.bf16 %v225, %v225
    %v379 = vunpack.c.l.b16 %v365
    %v380 = vunpack.c.l.b16 %v366
    %v381 = vpack.c.b16 %v380, %v379
    %vm382 = vcmask 64512
    %v384 = vsel %vm382, %v381, 0
    %vm386 = vcmask 1043456
    %v388 = vsel %vm386, %v373, 0
    %390 = vmatpush.bf16.msra.mxu0 0
    %391 = vmatpush.bf16.msra.mxu0 0
    %392 = vmatpush.bf16.msra.mxu0 0
    %393 = vmatpush.bf16.msra.mxu0 0
    %394 = vmatpush.bf16.msra.mxu0 0
    %395 = vmatpush.bf16.msra.mxu0 0
    %396 = vmatpush.bf16.msra.mxu0 0
    %397 = vmatpush.bf16.msra.mxu0 %v388
    %398 = vmatmul.bf16.gmra.mxu0 %v384
    %v399 = vpop.f32.mrf.mxu0
    %v400 = vadd.f32 %v33, %v399
    %v401 = vpop.f32.mrf.mxu0
    %v402 = vadd.f32 %v34, %v401
    %403 = vdwg.mxu0
    %v406 = vunpack.c.l.b16 %v367
    %v407 = vunpack.c.l.b16 %v368
    %v408 = vpack.c.b16 %v407, %v406
    %v410 = vsel %vm382, %v408, 0
    %v413 = vsel %vm386, %v374, 0
    %415 = vmatpush.bf16.msra.mxu0 0
    %416 = vmatpush.bf16.msra.mxu0 0
    %417 = vmatpush.bf16.msra.mxu0 0
    %418 = vmatpush.bf16.msra.mxu0 0
    %419 = vmatpush.bf16.msra.mxu0 0
    %420 = vmatpush.bf16.msra.mxu0 0
    %421 = vmatpush.bf16.msra.mxu0 0
    %422 = vmatpush.bf16.msra.mxu0 %v413
    %423 = vmatmul.bf16.gmra.mxu0 %v410
    %v424 = vpop.f32.mrf.mxu0
    %v425 = vadd.f32 %v33, %v424
    %v426 = vpop.f32.mrf.mxu0
    %v427 = vadd.f32 %v34, %v426
    %428 = vdwg.mxu0
    %v431 = vunpack.c.l.b16 %v369
    %v432 = vunpack.c.l.b16 %v370
    %v433 = vpack.c.b16 %v432, %v431
    %v435 = vsel %vm382, %v433, 0
    %v438 = vsel %vm386, %v375, 0
    %440 = vmatpush.bf16.msra.mxu0 0
    %441 = vmatpush.bf16.msra.mxu0 0
    %442 = vmatpush.bf16.msra.mxu0 0
    %443 = vmatpush.bf16.msra.mxu0 0
    %444 = vmatpush.bf16.msra.mxu0 0
    %445 = vmatpush.bf16.msra.mxu0 0
    %446 = vmatpush.bf16.msra.mxu0 0
    %447 = vmatpush.bf16.msra.mxu0 %v438
    %448 = vmatmul.bf16.gmra.mxu0 %v435
    %v449 = vpop.f32.mrf.mxu0
    %v450 = vadd.f32 %v33, %v449
    %v451 = vpop.f32.mrf.mxu0
    %v452 = vadd.f32 %v34, %v451
    %453 = vdwg.mxu0
    %v456 = vunpack.c.l.b16 %v371
    %v457 = vunpack.c.l.b16 %v372
    %v458 = vpack.c.b16 %v457, %v456
    %v460 = vsel %vm382, %v458, 0
    %v463 = vsel %vm386, %v376, 0
    %465 = vmatpush.bf16.msra.mxu0 0
    %466 = vmatpush.bf16.msra.mxu0 0
    %467 = vmatpush.bf16.msra.mxu0 0
    %468 = vmatpush.bf16.msra.mxu0 0
    %469 = vmatpush.bf16.msra.mxu0 0
    %470 = vmatpush.bf16.msra.mxu0 0
    %471 = vmatpush.bf16.msra.mxu0 0
    %472 = vmatpush.bf16.msra.mxu0 %v463
    %473 = vmatmul.bf16.gmra.mxu0 %v460
    %v474 = vpop.f32.mrf.mxu0
    %v475 = vadd.f32 %v33, %v474
    %v476 = vpop.f32.mrf.mxu0
    %v477 = vadd.f32 %v34, %v476
    %478 = vdwg.mxu0
    %vm479 = vcmask 130048
    %v480 = vsel %vm479, %v400, -inf
    %481 = vmax.xlane.f32.xlu0 %v480
    %v482 = vpop.xlane.xlu0 %481
    %v483 = vsel %vm479, %v402, -inf
    %484 = vmax.xlane.f32.xlu0 %v483
    %v485 = vpop.xlane.xlu0 %484
    %v486 = vsel %vm479, %v425, -inf
    %487 = vmax.xlane.f32.xlu0 %v486
    %v488 = vpop.xlane.xlu0 %487
    %v489 = vsel %vm479, %v427, -inf
    %490 = vmax.xlane.f32.xlu0 %v489
    %v491 = vpop.xlane.xlu0 %490
    %v492 = vsel %vm479, %v450, -inf
    %493 = vmax.xlane.f32.xlu0 %v492
    %v494 = vpop.xlane.xlu0 %493
    %v495 = vsel %vm479, %v452, -inf
    %496 = vmax.xlane.f32.xlu0 %v495
    %v497 = vpop.xlane.xlu0 %496
    %v498 = vsel %vm479, %v475, -inf
    %499 = vmax.xlane.f32.xlu0 %v498
    %v500 = vpop.xlane.xlu0 %499
    %v501 = vsel %vm479, %v477, -inf
    %502 = vmax.xlane.f32.xlu0 %v501
    %v503 = vpop.xlane.xlu0 %502
    %v504 = vsub.f32 %v400, %v482
    %v505 = vsub.f32 %v402, %v485
    %v506 = vsub.f32 %v425, %v488
    %v507 = vsub.f32 %v427, %v491
    %v508 = vsub.f32 %v450, %v494
    %v509 = vsub.f32 %v452, %v497
    %v510 = vsub.f32 %v475, %v500
    %v511 = vsub.f32 %v477, %v503
    %v512 = vmul.f32 %v504, 1.442695
    %v513 = vpow.pop %v512
    %v514 = vmul.f32 %v505, 1.442695
    %v515 = vpow.pop %v514
    %v516 = vmul.f32 %v506, 1.442695
    %v517 = vpow.pop %v516
    %v518 = vmul.f32 %v507, 1.442695
    %v519 = vpow.pop %v518
    %v520 = vmul.f32 %v508, 1.442695
    %v521 = vpow.pop %v520
    %v522 = vmul.f32 %v509, 1.442695
    %v523 = vpow.pop %v522
    %v524 = vmul.f32 %v510, 1.442695
    %v525 = vpow.pop %v524
    %v526 = vmul.f32 %v511, 1.442695
    %v527 = vpow.pop %v526
    %v528 = vsel %vm479, %v513, 0.0
    %529 = vadd.xlane.f32.xlu0 %v528
    %v530 = vpop.xlane.xlu0 %529
    %v531 = vsel %vm479, %v515, 0.0
    %532 = vadd.xlane.f32.xlu0 %v531
    %v533 = vpop.xlane.xlu0 %532
    %v534 = vsel %vm479, %v517, 0.0
    %535 = vadd.xlane.f32.xlu0 %v534
    %v536 = vpop.xlane.xlu0 %535
    %v537 = vsel %vm479, %v519, 0.0
    %538 = vadd.xlane.f32.xlu0 %v537
    %v539 = vpop.xlane.xlu0 %538
    %v540 = vsel %vm479, %v521, 0.0
    %541 = vadd.xlane.f32.xlu0 %v540
    %v542 = vpop.xlane.xlu0 %541
    %v543 = vsel %vm479, %v523, 0.0
    %544 = vadd.xlane.f32.xlu0 %v543
    %v545 = vpop.xlane.xlu0 %544
    %v546 = vsel %vm479, %v525, 0.0
    %547 = vadd.xlane.f32.xlu0 %v546
    %v548 = vpop.xlane.xlu0 %547
    %v549 = vsel %vm479, %v527, 0.0
    %550 = vadd.xlane.f32.xlu0 %v549
    %v551 = vpop.xlane.xlu0 %550
    %v552 = vpack.c.bf16 %v513, %v513
    %v553 = vpack.c.bf16 %v515, %v515
    %v554 = vpack.c.bf16 %v517, %v517
    %v555 = vpack.c.bf16 %v519, %v519
    %v556 = vpack.c.bf16 %v521, %v521
    %v557 = vpack.c.bf16 %v523, %v523
    %v558 = vpack.c.bf16 %v525, %v525
    %v559 = vpack.c.bf16 %v527, %v527
    %v560 = vpack.c.bf16 %v228, %v228
    %v561 = vpack.c.bf16 %v230, %v230
    %v562 = vpack.c.bf16 %v233, %v233
    %v563 = vpack.c.bf16 %v235, %v235
    %v566 = vunpack.c.l.b16 %v552
    %v567 = vunpack.c.l.b16 %v553
    %v568 = vpack.c.b16 %v567, %v566
    %v570 = vsel %vm479, %v568, 0
    %v573 = vsel %vm479, %v560, 0
    %575 = vmatpush.bf16.xpose.msra.mxu0 0
    %576 = vmatpush.bf16.xpose.msra.mxu0 0
    %577 = vmatpush.bf16.xpose.msra.mxu0 0
    %578 = vmatpush.bf16.xpose.msra.mxu0 0
    %579 = vmatpush.bf16.xpose.msra.mxu0 0
    %580 = vmatpush.bf16.xpose.msra.mxu0 0
    %581 = vmatpush.bf16.xpose.msra.mxu0 0
    %582 = vmatpush.bf16.xpose.msra.mxu0 %v573
    %583 = vmatmul.bf16.gmra.mxu0 %v570
    %v584 = vpop.f32.mrf.mxu0
    %v585 = vadd.f32 0.0, %v584
    %v586 = vpop.f32.mrf.mxu0
    %v587 = vadd.f32 0.0, %v586
    %588 = vdwg.mxu0
    %v591 = vunpack.c.l.b16 %v554
    %v592 = vunpack.c.l.b16 %v555
    %v593 = vpack.c.b16 %v592, %v591
    %v595 = vsel %vm479, %v593, 0
    %v598 = vsel %vm479, %v561, 0
    %600 = vmatpush.bf16.xpose.msra.mxu0 0
    %601 = vmatpush.bf16.xpose.msra.mxu0 0
    %602 = vmatpush.bf16.xpose.msra.mxu0 0
    %603 = vmatpush.bf16.xpose.msra.mxu0 0
    %604 = vmatpush.bf16.xpose.msra.mxu0 0
    %605 = vmatpush.bf16.xpose.msra.mxu0 0
    %606 = vmatpush.bf16.xpose.msra.mxu0 0
    %607 = vmatpush.bf16.xpose.msra.mxu0 %v598
    %608 = vmatmul.bf16.gmra.mxu0 %v595
    %v609 = vpop.f32.mrf.mxu0
    %v610 = vadd.f32 0.0, %v609
    %v611 = vpop.f32.mrf.mxu0
    %v612 = vadd.f32 0.0, %v611
    %613 = vdwg.mxu0
    %v616 = vunpack.c.l.b16 %v556
    %v617 = vunpack.c.l.b16 %v557
    %v618 = vpack.c.b16 %v617, %v616
    %v620 = vsel %vm479, %v618, 0
    %v623 = vsel %vm479, %v562, 0
    %625 = vmatpush.bf16.xpose.msra.mxu0 0
    %626 = vmatpush.bf16.xpose.msra.mxu0 0
    %627 = vmatpush.bf16.xpose.msra.mxu0 0
    %628 = vmatpush.bf16.xpose.msra.mxu0 0
    %629 = vmatpush.bf16.xpose.msra.mxu0 0
    %630 = vmatpush.bf16.xpose.msra.mxu0 0
    %631 = vmatpush.bf16.xpose.msra.mxu0 0
    %632 = vmatpush.bf16.xpose.msra.mxu0 %v623
    %633 = vmatmul.bf16.gmra.mxu0 %v620
    %v634 = vpop.f32.mrf.mxu0
    %v635 = vadd.f32 0.0, %v634
    %v636 = vpop.f32.mrf.mxu0
    %v637 = vadd.f32 0.0, %v636
    %638 = vdwg.mxu0
    %v641 = vunpack.c.l.b16 %v558
    %v642 = vunpack.c.l.b16 %v559
    %v643 = vpack.c.b16 %v642, %v641
    %v645 = vsel %vm479, %v643, 0
    %v648 = vsel %vm479, %v563, 0
    %650 = vmatpush.bf16.xpose.msra.mxu0 0
    %651 = vmatpush.bf16.xpose.msra.mxu0 0
    %652 = vmatpush.bf16.xpose.msra.mxu0 0
    %653 = vmatpush.bf16.xpose.msra.mxu0 0
    %654 = vmatpush.bf16.xpose.msra.mxu0 0
    %655 = vmatpush.bf16.xpose.msra.mxu0 0
    %656 = vmatpush.bf16.xpose.msra.mxu0 0
    %657 = vmatpush.bf16.xpose.msra.mxu0 %v648
    %658 = vmatmul.bf16.gmra.mxu0 %v645
    %v659 = vpop.f32.mrf.mxu0
    %v660 = vadd.f32 0.0, %v659
    %v661 = vpop.f32.mrf.mxu0
    %v662 = vadd.f32 0.0, %v661
    %663 = vdwg.mxu0
    %v664 = vrcp.pop %v530
    %v665 = vrcp.pop %v533
    %v666 = vrcp.pop %v536
    %v667 = vrcp.pop %v539
    %v668 = vrcp.pop %v542
    %v669 = vrcp.pop %v545
    %v670 = vrcp.pop %v548
    %v671 = vrcp.pop %v551
    %v672 = vmul.f32 %v585, %v664
    %v673 = vmul.f32 %v587, %v665
    %v674 = vmul.f32 %v610, %v666
    %v675 = vmul.f32 %v612, %v667
    %v676 = vmul.f32 %v635, %v668
    %v677 = vmul.f32 %v637, %v669
    %v678 = vmul.f32 %v660, %v670
    %v679 = vmul.f32 %v662, %v671
    %v680 = vpack.c.bf16 %v672, %v672
    %v681 = vpack.c.bf16 %v673, %v673
    %v682 = vpack.c.bf16 %v674, %v674
    %v683 = vpack.c.bf16 %v675, %v675
    %v684 = vpack.c.bf16 %v676, %v676
    %v685 = vpack.c.bf16 %v677, %v677
    %v686 = vpack.c.bf16 %v678, %v678
    %v687 = vpack.c.bf16 %v679, %v679
    %v690 = vunpack.c.l.b16 %v680
    %v691 = vunpack.c.l.b16 %v681
    %v692 = vpack.c.b16 %v691, %v690
    %v694 = vsel %vm382, %v692, 0
    %v697 = vsel %vm386, %v49, 0
    %699 = vmatpush.bf16.msra.mxu0 0
    %700 = vmatpush.bf16.msra.mxu0 0
    %701 = vmatpush.bf16.msra.mxu0 0
    %702 = vmatpush.bf16.msra.mxu0 0
    %703 = vmatpush.bf16.msra.mxu0 0
    %704 = vmatpush.bf16.msra.mxu0 0
    %705 = vmatpush.bf16.msra.mxu0 0
    %706 = vmatpush.bf16.msra.mxu0 %v697
    %707 = vmatmul.bf16.gmra.mxu0 %v694
    %v708 = vpop.f32.mrf.mxu0
    %v709 = vadd.f32 0.0, %v708
    %v710 = vpop.f32.mrf.mxu0
    %v711 = vadd.f32 0.0, %v710
    %712 = vdwg.mxu0
    %v715 = vunpack.c.l.b16 %v682
    %v716 = vunpack.c.l.b16 %v683
    %v717 = vpack.c.b16 %v716, %v715
    %v719 = vsel %vm382, %v717, 0
    %v722 = vsel %vm386, %v50, 0
    %724 = vmatpush.bf16.msra.mxu0 0
    %725 = vmatpush.bf16.msra.mxu0 0
    %726 = vmatpush.bf16.msra.mxu0 0
    %727 = vmatpush.bf16.msra.mxu0 0
    %728 = vmatpush.bf16.msra.mxu0 0
    %729 = vmatpush.bf16.msra.mxu0 0
    %730 = vmatpush.bf16.msra.mxu0 0
    %731 = vmatpush.bf16.msra.mxu0 %v722
    %732 = vmatmul.bf16.gmra.mxu0 %v719
    %v733 = vpop.f32.mrf.mxu0
    %v734 = vadd.f32 0.0, %v733
    %v735 = vpop.f32.mrf.mxu0
    %v736 = vadd.f32 0.0, %v735
    %737 = vdwg.mxu0
    %v740 = vunpack.c.l.b16 %v684
    %v741 = vunpack.c.l.b16 %v685
    %v742 = vpack.c.b16 %v741, %v740
    %v744 = vsel %vm382, %v742, 0
    %v747 = vsel %vm386, %v51, 0
    %749 = vmatpush.bf16.msra.mxu0 0
    %750 = vmatpush.bf16.msra.mxu0 0
    %751 = vmatpush.bf16.msra.mxu0 0
    %752 = vmatpush.bf16.msra.mxu0 0
    %753 = vmatpush.bf16.msra.mxu0 0
    %754 = vmatpush.bf16.msra.mxu0 0
    %755 = vmatpush.bf16.msra.mxu0 0
    %756 = vmatpush.bf16.msra.mxu0 %v747
    %757 = vmatmul.bf16.gmra.mxu0 %v744
    %v758 = vpop.f32.mrf.mxu0
    %v759 = vadd.f32 0.0, %v758
    %v760 = vpop.f32.mrf.mxu0
    %v761 = vadd.f32 0.0, %v760
    %762 = vdwg.mxu0
    %v765 = vunpack.c.l.b16 %v686
    %v766 = vunpack.c.l.b16 %v687
    %v767 = vpack.c.b16 %v766, %v765
    %v769 = vsel %vm382, %v767, 0
    %v772 = vsel %vm386, %v52, 0
    %774 = vmatpush.bf16.msra.mxu0 0
    %775 = vmatpush.bf16.msra.mxu0 0
    %776 = vmatpush.bf16.msra.mxu0 0
    %777 = vmatpush.bf16.msra.mxu0 0
    %778 = vmatpush.bf16.msra.mxu0 0
    %779 = vmatpush.bf16.msra.mxu0 0
    %780 = vmatpush.bf16.msra.mxu0 0
    %781 = vmatpush.bf16.msra.mxu0 %v772
    %782 = vmatmul.bf16.gmra.mxu0 %v769
    %v783 = vpop.f32.mrf.mxu0
    %v784 = vadd.f32 0.0, %v783
    %v785 = vpop.f32.mrf.mxu0
    %v786 = vadd.f32 0.0, %v785
    %787 = vdwg.mxu0
    %v788 = vsel %vm83, %v709, 0.0
    %v789 = vsel %vm83, %v734, 0.0
    %v790 = vadd.f32 %v788, %v789
    %v791 = vsel %vm83, %v759, 0.0
    %v792 = vadd.f32 %v790, %v791
    %v793 = vsel %vm83, %v784, 0.0
    %v794 = vadd.f32 %v792, %v793
    %v795 = vsel %vm83, %v711, 0.0
    %v796 = vsel %vm83, %v736, 0.0
    %v797 = vadd.f32 %v795, %v796
    %v798 = vsel %vm83, %v761, 0.0
    %v799 = vadd.f32 %v797, %v798
    %v800 = vsel %vm83, %v786, 0.0
    %v801 = vadd.f32 %v799, %v800
    %v802 = vperm.slane %v35, 4
    %v803 = vadd.f32 %v794, %v802
    %v804 = vadd.f32 %v801, %v802
    %v805 = vadd.f32 %v19, %v803
    %v806 = vadd.f32 %v20, %v804
    %v807 = vsel %vm83, %v805, 0.0
    %808 = vadd.xlane.f32.xlu0 %v807
    %v809 = vpop.xlane.xlu0 %808
    %v810 = vsel %vm83, %v806, 0.0
    %811 = vadd.xlane.f32.xlu0 %v810
    %v812 = vpop.xlane.xlu0 %811
    %v813 = vmul.f32 %v809, %v101
    %v814 = vmul.f32 %v812, %v101
    %v815 = vsub.f32 %v805, %v813
    %v816 = vsub.f32 %v806, %v814
    %v817 = vmul.f32 %v815, %v815
    %v818 = vmul.f32 %v816, %v816
    %v819 = vsel %vm83, %v817, 0.0
    %820 = vadd.xlane.f32.xlu0 %v819
    %v821 = vpop.xlane.xlu0 %820
    %v822 = vsel %vm83, %v818, 0.0
    %823 = vadd.xlane.f32.xlu0 %v822
    %v824 = vpop.xlane.xlu0 %823
    %v825 = vmul.f32 %v821, %v101
    %v826 = vmul.f32 %v824, %v101
    %v827 = vadd.f32 %v825, 1e-05
    %v828 = vadd.f32 %v826, 1e-05
    %v829 = vrsqrt.pop %v827
    %v830 = vmul.f32 %v829, %v827
    %v831 = vmul.f32 %v830, %v829
    %v832 = vmul.f32 0.5, %v831
    %v833 = vsub.f32 1.5, %v832
    %v834 = vmul.f32 %v829, %v833
    %vm835 = vweird.f32 %v827
    %vm836 = vweird.f32 %v829
    %vm837 = vmor %vm835, %vm836
    %v838 = vsel %vm837, %v829, %v834
    %v839 = vrsqrt.pop %v828
    %v840 = vmul.f32 %v839, %v828
    %v841 = vmul.f32 %v840, %v839
    %v842 = vmul.f32 0.5, %v841
    %v843 = vsub.f32 1.5, %v842
    %v844 = vmul.f32 %v839, %v843
    %vm845 = vweird.f32 %v828
    %vm846 = vweird.f32 %v839
    %vm847 = vmor %vm845, %vm846
    %v848 = vsel %vm847, %v839, %v844
    %v849 = vmul.f32 %v815, %v838
    %v850 = vmul.f32 %v816, %v848
    %v851 = vperm.slane %v35, 2
    %v852 = vmul.f32 %v849, %v851
    %v853 = vmul.f32 %v850, %v851
    %v854 = vperm.slane %v35, 3
    %v855 = vadd.f32 %v852, %v854
    %v856 = vadd.f32 %v853, %v854
    %v857 = vpack.c.bf16 %v856, %v855
    %v858 = vld [vmem:[%s2] sm:$0xf]
    %v859 = vld [vmem:[%s2 + $0x4] sm:$0xf]
    %v860 = vld [vmem:[%s2 + $0x8] sm:$0xf]
    %v861 = vld [vmem:[%s2 + $0xc] sm:$0xf]
    %v862 = vperm.slane %v88, 6
    %v867 = vunpack.c.l.b16 %v858
    %v868 = vunpack.c.l.b16 %v859
    %v869 = vunpack.c.l.b16 %v860
    %v870 = vunpack.c.l.b16 %v861
    %v871 = vpack.c.b16 %v868, %v867
    %v872 = vpack.c.b16 %v870, %v869
    %v876 = vsel %vm83, %v857, 0
    %878 = vmatpush.bf16.msra.mxu0 0
    %879 = vmatpush.bf16.msra.mxu0 0
    %880 = vmatpush.bf16.msra.mxu0 0
    %881 = vmatpush.bf16.msra.mxu0 0
    %882 = vmatpush.bf16.msra.mxu0 0
    %883 = vmatpush.bf16.msra.mxu0 0
    %884 = vmatpush.bf16.msra.mxu0 %v872
    %885 = vmatpush.bf16.msra.mxu0 %v871
    %886 = vmatmul.bf16.gmra.mxu0 %v876
    %v887 = vpop.f32.mrf.mxu0
    %v888 = vadd.f32 %v862, %v887
    %v889 = vpop.f32.mrf.mxu0
    %v890 = vadd.f32 %v862, %v889
    %891 = vdwg.mxu0
    %v892 = vmul.f32 %v888, 0.5
    %v893 = vmul.f32 %v890, 0.5
    %v894 = vmul.f32 %v888, 0.70710677
    %v895 = vmul.f32 %v890, 0.70710677
    %v896 = vmul.f32 %v894, %v894
    %v897 = vmin.f32 16.0, %v896
    %v898 = vmul.f32 %v897, 2.1237322e-06
    %v899 = vadd.f32 %v898, 0.00028619796
    %v900 = vmul.f32 %v897, %v899
    %v901 = vadd.f32 %v900, 0.0036580483
    %v902 = vmul.f32 %v897, %v901
    %v903 = vadd.f32 %v902, 0.05243302
    %v904 = vmul.f32 %v897, %v903
    %v905 = vadd.f32 %v904, 0.18741608
    %v906 = vmul.f32 %v897, %v905
    %v907 = vadd.f32 %v906, 1.1283791
    %v908 = vmul.f32 %v894, %v907
    %v909 = vmul.f32 %v897, 3.8918573e-05
    %v910 = vadd.f32 %v909, 0.001143296
    %v911 = vmul.f32 %v897, %v910
    %v912 = vadd.f32 %v911, 0.014752088
    %v913 = vmul.f32 %v897, %v912
    %v914 = vadd.f32 %v913, 0.112945676
    %v915 = vmul.f32 %v897, %v914
    %v916 = vadd.f32 %v915, 0.4994258
    %v917 = vmul.f32 %v897, %v916
    %v918 = vadd.f32 %v917, 1.0
    %v919 = vrcp.pop %v918
    %v920 = vmul.f32 %v918, %v919
    %v921 = vsub.f32 1.0, %v920
    %v922 = vmul.f32 %v919, %v921
    %v923 = vadd.f32 %v919, %v922
    %vm924 = vweird.f32 %v918
    %vm925 = vweird.f32 %v919
    %vm926 = vmor %vm924, %vm925
    %v927 = vsel %vm926, %v919, %v923
    %v928 = vand.u32 2147483647, %v918
    %vm929 = vcmp.eq.f32.partialorder %v928, 8.507059e+37
    %v930 = vand.u32 %v918, 2147483648
    %v931 = vor.u32 1.1754944e-38, %v930
    %v932 = vsel %vm929, %v931, %v927
    %v933 = vmul.f32 %v908, %v932
    %v934 = vmin.f32 %v933, 1.0
    %v935 = vmax.f32 %v934, -1.0
    %v936 = vmul.f32 %v895, %v895
    %v937 = vmin.f32 16.0, %v936
    %v938 = vmul.f32 %v937, 2.1237322e-06
    %v939 = vadd.f32 %v938, 0.00028619796
    %v940 = vmul.f32 %v937, %v939
    %v941 = vadd.f32 %v940, 0.0036580483
    %v942 = vmul.f32 %v937, %v941
    %v943 = vadd.f32 %v942, 0.05243302
    %v944 = vmul.f32 %v937, %v943
    %v945 = vadd.f32 %v944, 0.18741608
    %v946 = vmul.f32 %v937, %v945
    %v947 = vadd.f32 %v946, 1.1283791
    %v948 = vmul.f32 %v895, %v947
    %v949 = vmul.f32 %v937, 3.8918573e-05
    %v950 = vadd.f32 %v949, 0.001143296
    %v951 = vmul.f32 %v937, %v950
    %v952 = vadd.f32 %v951, 0.014752088
    %v953 = vmul.f32 %v937, %v952
    %v954 = vadd.f32 %v953, 0.112945676
    %v955 = vmul.f32 %v937, %v954
    %v956 = vadd.f32 %v955, 0.4994258
    %v957 = vmul.f32 %v937, %v956
    %v958 = vadd.f32 %v957, 1.0
    %v959 = vrcp.pop %v958
    %v960 = vmul.f32 %v958, %v959
    %v961 = vsub.f32 1.0, %v960
    %v962 = vmul.f32 %v959, %v961
    %v963 = vadd.f32 %v959, %v962
    %vm964 = vweird.f32 %v958
    %vm965 = vweird.f32 %v959
    %vm966 = vmor %vm964, %vm965
    %v967 = vsel %vm966, %v959, %v963
    %v968 = vand.u32 2147483647, %v958
    %vm969 = vcmp.eq.f32.partialorder %v968, 8.507059e+37
    %v970 = vand.u32 %v958, 2147483648
    %v971 = vor.u32 1.1754944e-38, %v970
    %v972 = vsel %vm969, %v971, %v967
    %v973 = vmul.f32 %v948, %v972
    %v974 = vmin.f32 %v973, 1.0
    %v975 = vmax.f32 %v974, -1.0
    %v976 = vadd.f32 %v935, 1.0
    %v977 = vadd.f32 %v975, 1.0
    %v978 = vmul.f32 %v892, %v976
    %v979 = vmul.f32 %v893, %v977
    %v980 = vpack.c.bf16 %v979, %v978
    %v981 = vperm.slane %v35, 5
    %v998 = vunpack.c.l.b16 %v53
    %v999 = vunpack.c.l.b16 %v54
    %v1000 = vunpack.c.l.b16 %v55
    %v1001 = vunpack.c.l.b16 %v56
    %v1002 = vunpack.c.l.b16 %v57
    %v1003 = vunpack.c.l.b16 %v58
    %v1004 = vunpack.c.l.b16 %v59
    %v1005 = vunpack.c.l.b16 %v60
    %v1006 = vunpack.c.l.b16 %v61
    %v1007 = vunpack.c.l.b16 %v62
    %v1008 = vunpack.c.l.b16 %v63
    %v1009 = vunpack.c.l.b16 %v64
    %v1010 = vunpack.c.l.b16 %v65
    %v1011 = vunpack.c.l.b16 %v66
    %v1012 = vunpack.c.l.b16 %v67
    %v1013 = vunpack.c.l.b16 %v68
    %v1014 = vpack.c.b16 %v999, %v998
    %v1015 = vpack.c.b16 %v1001, %v1000
    %v1016 = vpack.c.b16 %v1003, %v1002
    %v1017 = vpack.c.b16 %v1005, %v1004
    %v1018 = vpack.c.b16 %v1007, %v1006
    %v1019 = vpack.c.b16 %v1009, %v1008
    %v1020 = vpack.c.b16 %v1011, %v1010
    %v1021 = vpack.c.b16 %v1013, %v1012
    %1030 = vmatpush.bf16.msra.mxu0 %v1021
    %1031 = vmatpush.bf16.msra.mxu0 %v1020
    %1032 = vmatpush.bf16.msra.mxu0 %v1019
    %1033 = vmatpush.bf16.msra.mxu0 %v1018
    %1034 = vmatpush.bf16.msra.mxu0 %v1017
    %1035 = vmatpush.bf16.msra.mxu0 %v1016
    %1036 = vmatpush.bf16.msra.mxu0 %v1015
    %1037 = vmatpush.bf16.msra.mxu0 %v1014
    %1038 = vmatmul.bf16.gmra.mxu0 %v980
    %v1039 = vpop.f32.mrf.mxu0
    %v1040 = vadd.f32 %v981, %v1039
    %v1041 = vpop.f32.mrf.mxu0
    %v1042 = vadd.f32 %v981, %v1041
    %1043 = vdwg.mxu0
    %v1044 = vadd.f32 %v805, %v1040
    %v1045 = vadd.f32 %v806, %v1042
    %1046 = vst.msk [vmem:[#allocation2] sm:$0xff] %vm83, %v1044
    %1047 = vst.msk [vmem:[#allocation2 + $0x8] sm:$0xff] %vm83, %v1045
    // Predicated region
    $region18: #{tpu_custom_call.1} parent=1 // pred_check
      _
    $region19: #{tpu_custom_call.1} parent=1 // pred_check_branch
      %1049 = sbr.rel (0) target = $region21
    $region20: #{tpu_custom_call.1} parent=1 // pred_region
      %1051 = vsyncadd [#allocation3], 0
      %s1052 = sshll.u32 [#allocation2], 4
      %s1053 = int_to_ptr.vmem [resolvable:$true] %s1052
      %s1054 = sshll.u32 %s4, 4
      %s1055 = int_to_ptr.hbm [resolvable:$true] %s1054
      %1060 = dma.vmem_to_hbm [thread:$0]  %s1053, 256, %s1055, [#allocation3], 128, 128, 8
    $region21: #{tpu_custom_call.1} parent=1 // pred_fallthru
      _
    // Predicated region
    $region22: #{tpu_custom_call.1} parent=1 // pred_check
      _
    $region23: #{tpu_custom_call.1} parent=1 // pred_check_branch
      %1062 = sbr.rel (0) target = $region25
    $region24: #{tpu_custom_call.1} parent=1 // pred_region
      %1064 = dma.done [#allocation3], 256
    $region25: #{tpu_custom_call.1} parent=1 // pred_fallthru
      _
    %1065 = vsyncpa [#allocation3], 1

</llo_original>
